<compile_context>
chip_gen: v5e
topology: v5e:2x2
jax: 0.10.0
libtpu: 0.0.40
codegen_flags: <defaults>
</compile_context>

<pallas_src>
from functools import partial

import jax
import jax.numpy as jnp
import numpy as np
from jax import lax
from jax.experimental import pallas as pl
from jax.experimental.pallas import tpu as pltpu

NEG_INF = -1e30


# ------------------------------ helpers -------------------------------------

def _pick_tile(n, target):
    """Largest divisor of n that is <= target and a multiple of 8; else n (full dim)."""
    if n <= target:
        return n
    start = target - (target % 8)
    for t in range(start, 7, -8):
        if n % t == 0:
            return t
    return n


# --------------------------- linear kernels ----------------------------------

def _linear_bias_kernel(x_ref, w_ref, b_ref, o_ref):
    o_ref[...] = (
        jnp.dot(x_ref[...], w_ref[...], preferred_element_type=jnp.float32)
        + b_ref[...]
    ).astype(o_ref.dtype)


def _linear_nobias_kernel(x_ref, w_ref, o_ref):
    o_ref[...] = jnp.dot(
        x_ref[...], w_ref[...], preferred_element_type=jnp.float32
    ).astype(o_ref.dtype)


def linear_pallas(x, w, b=None, tm_target=512):
    """y = x @ w (+ b).  x: (M, K), w: (K, Nout).  Row-tiled, weights resident."""
    M, K = x.shape
    Nout = w.shape[1]
    tm = _pick_tile(M, tm_target)
    grid = (M // tm,)
    x_spec = pl.BlockSpec((tm, K), lambda i: (i, 0))
    w_spec = pl.BlockSpec((K, Nout), lambda i: (0, 0))
    o_spec = pl.BlockSpec((tm, Nout), lambda i: (i, 0))
    cparams = pltpu.CompilerParams(dimension_semantics=("parallel",))
    out_shape = jax.ShapeDtypeStruct((M, Nout), x.dtype)
    if b is None:
        return pl.pallas_call(
            _linear_nobias_kernel, out_shape=out_shape, grid=grid,
            in_specs=[x_spec, w_spec], out_specs=o_spec,
            compiler_params=cparams,
        )(x, w)
    b2 = b.reshape(1, Nout)
    b_spec = pl.BlockSpec((1, Nout), lambda i: (0, 0))
    return pl.pallas_call(
        _linear_bias_kernel, out_shape=out_shape, grid=grid,
        in_specs=[x_spec, w_spec, b_spec], out_specs=o_spec,
        compiler_params=cparams,
    )(x, w, b2)


# ----------------------- flash rel-pos attention kernel -----------------------

def _flash_relpos_kernel(q_ref, k_ref, v_ref, rflat_ref, maskq_ref, sumsel_ref,
                         ekT_ref, o_ref, rel_sc, m_sc, l_sc, acc_sc, *, scale):
    ki = pl.program_id(2)
    nh, tq, hd = q_ref.shape[1], q_ref.shape[2], q_ref.shape[3]
    tkv = k_ref.shape[2]

    @pl.when(ki == 0)
    def _init():
        m_sc[...] = jnp.full(m_sc.shape, NEG_INF, jnp.float32)
        l_sc[...] = jnp.zeros(l_sc.shape, jnp.float32)
        acc_sc[...] = jnp.zeros(acc_sc.shape, jnp.float32)
        # Factored rel-pos rows (uses UNSCALED q, as in the PyTorch module):
        #   rel[h, i, :] = [ q_hi . Rh[h(i), kh], q_hi . Rw[w(i), kw], q_hi . Rt[t(i), kt] ]
        q2 = q_ref[0].reshape(nh * tq, hd)                                 # (nh*tq, hd)
        qm = lax.dot_general(q2, rflat_ref[...], (((1,), (1,)), ((), ())),
                             preferred_element_type=jnp.float32)           # (nh*tq, P)
        qm = (qm.reshape(nh, tq, -1) * maskq_ref[...][None, :, :]).reshape(nh * tq, -1)
        rel_sc[...] = lax.dot_general(qm, sumsel_ref[...],
                                      (((1,), (0,)), ((), ())),
                                      preferred_element_type=jnp.float32)  # (nh*tq, D)

    qs = q_ref[0].astype(jnp.float32) * scale                              # (nh, tq, hd)
    k = k_ref[0]                                                           # (nh, tkv, hd)
    v = v_ref[0]                                                           # (nh, tkv, hd)

    # batched q @ k^T over heads
    s = lax.dot_general(qs, k, (((2,), (2,)), ((0,), (0,))),
                        preferred_element_type=jnp.float32)                # (nh, tq, tkv)
    # expand rel-pos rows over this kv tile: bias[h, i, j] = rel[h, i] . ekT[j]
    bias = lax.dot_general(rel_sc[...], ekT_ref[...], (((1,), (1,)), ((), ())),
                           preferred_element_type=jnp.float32)             # (nh*tq, tkv)
    s = s + bias.reshape(nh, tq, tkv)

    m_prev = m_sc[...]
    m_new = jnp.maximum(m_prev, jnp.max(s, axis=-1, keepdims=True))
    alpha = jnp.exp(m_prev - m_new)
    p = jnp.exp(s - m_new)
    l_sc[...] = alpha * l_sc[...] + jnp.sum(p, axis=-1, keepdims=True)
    acc_sc[...] = alpha * acc_sc[...] + lax.dot_general(
        p.astype(v.dtype), v, (((2,), (1,)), ((0,), (0,))),
        preferred_element_type=jnp.float32)                                # (nh, tq, hd)
    m_sc[...] = m_new

    @pl.when(ki == pl.num_programs(2) - 1)
    def _finalize():
        l = l_sc[...]
        inv = pl.reciprocal(l, approx=True)
        inv = inv * (2.0 - l * inv)        # one Newton step -> ~f32 accuracy
        o_ref[0] = (acc_sc[...] * inv).astype(o_ref.dtype)


def attention_pallas(q, k, v, rflat, maskq, sumsel, ekT, scale,
                     tq_target=128, tkv_target=128):
    """q/k/v: (B, nh, N, hd); rflat: (P, hd); maskq: (N, P); sumsel: (P, D); ekT: (N, D)."""
    B, nh, N, hd = q.shape
    P, D = sumsel.shape
    tq = _pick_tile(N, tq_target)
    tkv = _pick_tile(N, tkv_target)
    nq, nkv = N // tq, N // tkv
    kern = partial(_flash_relpos_kernel, scale=scale)
    return pl.pallas_call(
        kern,
        out_shape=jax.ShapeDtypeStruct((B, nh, N, hd), q.dtype),
        grid_spec=pltpu.PrefetchScalarGridSpec(
            num_scalar_prefetch=0,
            grid=(B, nq, nkv),
            in_specs=[
                pl.BlockSpec((1, nh, tq, hd), lambda b, i, j: (b, 0, i, 0)),    # q
                pl.BlockSpec((1, nh, tkv, hd), lambda b, i, j: (b, 0, j, 0)),   # k
                pl.BlockSpec((1, nh, tkv, hd), lambda b, i, j: (b, 0, j, 0)),   # v
                pl.BlockSpec((P, hd), lambda b, i, j: (0, 0)),                  # rflat (resident)
                pl.BlockSpec((tq, P), lambda b, i, j: (i, 0)),                  # maskq
                pl.BlockSpec((P, D), lambda b, i, j: (0, 0)),                   # sumsel (resident)
                pl.BlockSpec((tkv, D), lambda b, i, j: (j, 0)),                 # ekT
            ],
            out_specs=pl.BlockSpec((1, nh, tq, hd), lambda b, i, j: (b, 0, i, 0)),
            scratch_shapes=[
                pltpu.VMEM((nh * tq, D), jnp.float32),   # rel rows (per q tile)
                pltpu.VMEM((nh, tq, 1), jnp.float32),    # m
                pltpu.VMEM((nh, tq, 1), jnp.float32),    # l
                pltpu.VMEM((nh, tq, hd), jnp.float32),   # acc
            ],
        ),
        compiler_params=pltpu.CompilerParams(
            dimension_semantics=("parallel", "parallel", "arbitrary")),
    )(q, k, v, rflat, maskq, sumsel, ekT)


# ------------------------- rel-pos table construction ------------------------

def build_relpos_tables(rel_pos_h, rel_pos_w, rel_pos_t, T, H, W):
    """Constant, shape-dependent tables for the factored rel-pos bias.

    bias[i, j] = rel[i] . ekT[j]   with   rel = ((q @ rflat^T) * maskq) @ sumsel
    """
    hd = rel_pos_h.shape[1]
    dtype = rel_pos_h.dtype
    # q_shape == k_shape == input_size here, so get_rel_pos is the identity branch.
    dist_h = jnp.arange(H)[:, None] - jnp.arange(H)[None, :] + (H - 1)
    dist_w = jnp.arange(W)[:, None] - jnp.arange(W)[None, :] + (W - 1)
    dist_t = jnp.arange(T)[:, None] - jnp.arange(T)[None, :] + (T - 1)
    Rh = rel_pos_h[dist_h]      # (H, H, hd)
    Rw = rel_pos_w[dist_w]      # (W, W, hd)
    Rt = rel_pos_t[dist_t]      # (T, T, hd)

    rflat = jnp.concatenate(
        [Rh.reshape(H * H, hd), Rw.reshape(W * W, hd), Rt.reshape(T * T, hd)],
        axis=0)                                                    # (P, hd)

    N = T * H * W
    idx = jnp.arange(N)
    t_idx = idx // (H * W)
    h_idx = (idx // W) % H
    w_idx = idx % W

    def onehot(i, n):
        return (i[:, None] == jnp.arange(n)[None, :]).astype(dtype)

    # maskq (N, P): for table entry p = a*D + b, select rows whose query position == a.
    maskq = jnp.concatenate(
        [jnp.repeat(onehot(h_idx, H), H, axis=1),
         jnp.repeat(onehot(w_idx, W), W, axis=1),
         jnp.repeat(onehot(t_idx, T), T, axis=1)], axis=1)         # (N, P)

    # sumsel (P, D): reduce over the query-position axis, route key position b
    # to its column in the concatenated (H + W + T) layout.
    P = H * H + W * W + T * T
    D = H + W + T
    sumsel = jnp.zeros((P, D), dtype)
    sumsel = sumsel.at[:H * H, :H].set(jnp.tile(jnp.eye(H, dtype=dtype), (H, 1)))
    sumsel = sumsel.at[H * H:H * H + W * W, H:H + W].set(
        jnp.tile(jnp.eye(W, dtype=dtype), (W, 1)))
    sumsel = sumsel.at[H * H + W * W:, H + W:].set(
        jnp.tile(jnp.eye(T, dtype=dtype), (T, 1)))

    # ekT (N, D): one-hot key positions (h, w, t) for the expansion matmul.
    ekT = jnp.concatenate(
        [onehot(h_idx, H), onehot(w_idx, W), onehot(t_idx, T)], axis=1)  # (N, D)
    return rflat, maskq, sumsel, ekT


# ------------------------------- forward pass --------------------------------

def attention_rel_pos_forward(x, params, num_heads):
    B, T, S, C = x.shape
    H = W = int(round(S ** 0.5))
    N = T * S
    hd = C // num_heads
    scale = hd ** (-0.5)

    # qkv projection (qkv_bias=False -> no bias term at all)
    x2 = x.reshape(B * N, C)
    qkv = linear_pallas(x2, params["w_qkv"], None)                          # (B*N, 3C)

    # head-major layout for the attention kernel (single fused XLA transpose).
    # TODO(synk): folding the head split into the attention BlockSpecs needs
    #             hd-wide lane blocks (hd % 128 != 0), kept as an XLA transpose.
    qkv = qkv.reshape(B, N, 3, num_heads, hd).transpose(2, 0, 3, 1, 4)      # (3,B,nh,N,hd)
    q, k, v = qkv[0], qkv[1], qkv[2]                                        # (B,nh,N,hd)

    rflat, maskq, sumsel, ekT = build_relpos_tables(
        params["rel_pos_h"], params["rel_pos_w"], params["rel_pos_t"], T, H, W)

    o = attention_pallas(q, k, v, rflat, maskq, sumsel, ekT, scale)         # (B,nh,N,hd)

    o = o.transpose(0, 2, 1, 3).reshape(B * N, C)
    y = linear_pallas(o, params["w_proj"], params["b_proj"])                # proj (drop p=0)
    return y.reshape(B, T, S, C)


# ------------------------- pure-JAX reference (check) ------------------------

def reference_forward(x, params, num_heads):
    B, T, S, C = x.shape
    H = W = int(round(S ** 0.5))
    N = T * S
    hd = C // num_heads
    scale = hd ** (-0.5)
    x2 = x.reshape(B, N, C)
    qkv = (x2 @ params["w_qkv"]).reshape(B, N, 3, num_heads, hd).transpose(2, 0, 3, 1, 4)
    q, k, v = qkv[0], qkv[1], qkv[2]
    attn = jnp.einsum("bhnc,bhmc->bhnm", q, k) * scale
    dist_h = jnp.arange(H)[:, None] - jnp.arange(H)[None, :] + (H - 1)
    dist_w = jnp.arange(W)[:, None] - jnp.arange(W)[None, :] + (W - 1)
    dist_t = jnp.arange(T)[:, None] - jnp.arange(T)[None, :] + (T - 1)
    Rh, Rw, Rt = params["rel_pos_h"][dist_h], params["rel_pos_w"][dist_w], params["rel_pos_t"][dist_t]
    r_q = q.reshape(B, num_heads, T, H, W, hd)
    rel_h = jnp.einsum("bythwc,hkc->bythwk", r_q, Rh)
    rel_w = jnp.einsum("bythwc,wkc->bythwk", r_q, Rw)
    rel_t = jnp.einsum("bythwc,tkc->bythwk", r_q, Rt)
    a6 = attn.reshape(B, num_heads, T, H, W, T, H, W)
    a6 = a6 + rel_h[:, :, :, :, :, None, :, None]
    a6 = a6 + rel_w[:, :, :, :, :, None, None, :]
    a6 = a6 + rel_t[:, :, :, :, :, :, None, None]
    attn = jax.nn.softmax(a6.reshape(B, num_heads, N, N), axis=-1)
    o = jnp.einsum("bhnm,bhmc->bhnc", attn, v).transpose(0, 2, 1, 3).reshape(B, N, C)
    y = o @ params["w_proj"] + params["b_proj"]
    return y.reshape(B, T, S, C)


# ----------------------------------- main ------------------------------------

if __name__ == "__main__":
    key = jax.random.PRNGKey(0)
    B, T, H, W = 2, 2, 4, 4           # input_size = (T, H, W)
    num_heads = 2
    C = 16
    head_dim = C // num_heads
    S = H * W

    ks = jax.random.split(key, 7)
    x = jax.random.normal(ks[0], (B, T, S, C), jnp.float32)
    # deterministic synthetic parameters (trunc_normal std=0.02 approximated by normal*0.02)
    params = {
        "w_qkv": 0.02 * jax.random.normal(ks[1], (C, 3 * C), jnp.float32),
        "w_proj": 0.02 * jax.random.normal(ks[2], (C, C), jnp.float32),
        "b_proj": 0.02 * jax.random.normal(ks[3], (C,), jnp.float32),
        "rel_pos_h": 0.02 * jax.random.normal(ks[4], (2 * H - 1, head_dim), jnp.float32),
        "rel_pos_w": 0.02 * jax.random.normal(ks[5], (2 * W - 1, head_dim), jnp.float32),
        "rel_pos_t": 0.02 * jax.random.normal(ks[6], (2 * T - 1, head_dim), jnp.float32),
    }

    y = attention_rel_pos_forward(x, params, num_heads)
    y = jax.block_until_ready(y)

    y_ref = reference_forward(x, params, num_heads)
    np.testing.assert_allclose(np.asarray(y), np.asarray(y_ref), rtol=5e-5, atol=5e-5)

    print("KERNEL_OK")
</pallas_src>

<mosaic_0001>
module attributes {stable_mosaic.version = 11 : i64} {
  func.func @_linear_nobias_kernel(%arg0: i32, %arg1: memref<64x16xf32, #tpu.memory_space<vmem>>, %arg2: memref<16x48xf32, #tpu.memory_space<vmem>>, %arg3: memref<64x48xf32, #tpu.memory_space<vmem>>) attributes {dimension_semantics = [#tpu.dimension_semantics<parallel>], iteration_bounds = array<i64: 1>, scalar_prefetch = 0 : i64, scratch_operands = 0 : i64, tpu.core_type = #tpu.core_type<tc>, window_params = [{transform_indices = @transform_0, window_bounds = array<i64: 64, 16>}, {pipeline_mode = #tpu.pipeline_mode<synchronous>, transform_indices = @transform_1, window_bounds = array<i64: 16, 48>}, {transform_indices = @transform_2, window_bounds = array<i64: 64, 48>}]} {
    %c0 = arith.constant 0 : index
    %c0_0 = arith.constant 0 : index
    %0 = vector.load %arg1[%c0, %c0_0] : memref<64x16xf32, #tpu.memory_space<vmem>>, vector<64x16xf32>
    %c0_1 = arith.constant 0 : index
    %c0_2 = arith.constant 0 : index
    %1 = vector.load %arg2[%c0_1, %c0_2] : memref<16x48xf32, #tpu.memory_space<vmem>>, vector<16x48xf32>
    %cst = arith.constant dense<0.000000e+00> : vector<64x48xf32>
    %2 = tpu.matmul %0, %1, %cst {dimension_numbers = #tpu.dot_dimension_numbers<[1], [0], [0], [1], [0, 0, 1, 1], [], []>} : vector<64x16xf32>, vector<16x48xf32>, vector<64x48xf32> -> vector<64x48xf32>
    %c0_3 = arith.constant 0 : index
    %c0_4 = arith.constant 0 : index
    %3 = vector.load %arg3[%c0_3, %c0_4] : memref<64x48xf32, #tpu.memory_space<vmem>>, vector<64x48xf32>
    tpu.vector_store %arg3[%c0_3, %c0_4], %2 {strides = array<i32>} : memref<64x48xf32, #tpu.memory_space<vmem>>, vector<64x48xf32>,
    return
  }
  func.func @transform_0(%arg0: i32) -> (i32, i32) {
    %c0_i32 = arith.constant 0 : i32
    %c0_i32_0 = arith.constant 0 : i32
    return %arg0, %c0_i32 : i32, i32
  }
  func.func @transform_1(%arg0: i32) -> (i32, i32) {
    %c0_i32 = arith.constant 0 : i32
    %c0_i32_0 = arith.constant 0 : i32
    %c0_i32_1 = arith.constant 0 : i32
    return %c0_i32, %c0_i32_0 : i32, i32
  }
  func.func @transform_2(%arg0: i32) -> (i32, i32) {
    %c0_i32 = arith.constant 0 : i32
    %c0_i32_0 = arith.constant 0 : i32
    return %arg0, %c0_i32 : i32, i32
  }
}

</mosaic_0001>

<llo_original>
// kernel: tpu_custom_call.1
$region0: #{tpu_custom_call.1}
  #allocation0 [shape = 'u32[]', space=smem, size = 0x4, offset = 0x4, fixed_abs, tag = 'smem constant byte address 0x4 - core index']
  #allocation1 [shape = 'u32[72,128]{1,0:T(1,128)}', space=vmem, size = 0x9000, scoped, tag = 'internal scratch']
  %s0 = inlined_call_operand.vmem [shape: f32[64,16], index: 0, kind: input, shape index: {}]
  %s1 = inlined_call_operand.vmem [shape: f32[16,48], index: 1, kind: input, shape index: {}]
  %s2 = inlined_call_operand.vmem [shape: f32[64,48], index: 2, kind: output, shape index: {}]
  %s3 = sld [smem:[#allocation0]]
  $region18: #{tpu_custom_call.1} parent=0
    _
  %s5 = ssub.s32 1, %s3
  %s6 = scalar_select 0, %s5, %s3
  // Predicated region
  $region2: #{tpu_custom_call.1} parent=0 // pred_check
    _
  $region3: #{tpu_custom_call.1} parent=0 // pred_check_branch
    %8 = sbr.rel (0) target = $region5
  $region4: #{tpu_custom_call.1} parent=0 // pred_region
    _
  $region5: #{tpu_custom_call.1} parent=0 // pred_fallthru
    _
  // Predicated region
  $region6: #{tpu_custom_call.1} parent=0 // pred_check
    _
  $region7: #{tpu_custom_call.1} parent=0 // pred_check_branch
    %10 = sbr.rel (0) target = $region9
  $region8: #{tpu_custom_call.1} parent=0 // pred_region
    _
  $region9: #{tpu_custom_call.1} parent=0 // pred_fallthru
    _
  %v11 = vld [vmem:[%s0] sm:$0xff]
  %v12 = vld [vmem:[%s0 + $0x8] sm:$0xff]
  %v13 = vld [vmem:[%s0 + $0x10] sm:$0xff]
  %v14 = vld [vmem:[%s0 + $0x18] sm:$0xff]
  %v15 = vld [vmem:[%s0 + $0x20] sm:$0xff]
  %v16 = vld [vmem:[%s0 + $0x28] sm:$0xff]
  %v17 = vld [vmem:[%s0 + $0x30] sm:$0xff]
  %v18 = vld [vmem:[%s0 + $0x38] sm:$0xff]
  %v19 = vld [vmem:[%s1] sm:$0xff]
  %v20 = vld [vmem:[%s1 + $0x8] sm:$0xff]
  %vm21 = vcmask 130048
  %v23 = vsel %vm21, %v11, 0
  %v26 = vsel %vm21, %v12, 0
  %v29 = vsel %vm21, %v13, 0
  %v32 = vsel %vm21, %v14, 0
  %v35 = vsel %vm21, %v15, 0
  %v38 = vsel %vm21, %v16, 0
  %v41 = vsel %vm21, %v17, 0
  %v44 = vsel %vm21, %v18, 0
  %46 = vmatpush.msra.mxu0 0.0
  %47 = vmatpush.msra.mxu0 0.0
  %48 = vmatpush.msra.mxu0 0.0
  %49 = vmatpush.msra.mxu0 0.0
  %50 = vmatpush.msra.mxu0 0.0
  %51 = vmatpush.msra.mxu0 0.0
  %52 = vmatpush.msra.mxu0 0.0
  %53 = vmatpush.msra.mxu0 0.0
  %54 = vmatpush.msra.mxu0 0.0
  %55 = vmatpush.msra.mxu0 0.0
  %56 = vmatpush.msra.mxu0 0.0
  %57 = vmatpush.msra.mxu0 0.0
  %58 = vmatpush.msra.mxu0 0.0
  %59 = vmatpush.msra.mxu0 0.0
  %60 = vmatpush.msra.mxu0 %v20
  %61 = vmatpush.msra.mxu0 %v19
  %62 = vmatmul.f32.gmra.mxu0 %v23
  %v63 = vpop.f32.mrf.mxu0
  %v64 = vadd.f32 0.0, %v63
  %65 = vmatmul.f32.gmra.mxu0 %v26
  %v66 = vpop.f32.mrf.mxu0
  %v67 = vadd.f32 0.0, %v66
  %68 = vmatmul.f32.gmra.mxu0 %v29
  %v69 = vpop.f32.mrf.mxu0
  %v70 = vadd.f32 0.0, %v69
  %71 = vmatmul.f32.gmra.mxu0 %v32
  %v72 = vpop.f32.mrf.mxu0
  %v73 = vadd.f32 0.0, %v72
  %74 = vmatmul.f32.gmra.mxu0 %v35
  %v75 = vpop.f32.mrf.mxu0
  %v76 = vadd.f32 0.0, %v75
  %77 = vmatmul.f32.gmra.mxu0 %v38
  %v78 = vpop.f32.mrf.mxu0
  %v79 = vadd.f32 0.0, %v78
  %80 = vmatmul.f32.gmra.mxu0 %v41
  %v81 = vpop.f32.mrf.mxu0
  %v82 = vadd.f32 0.0, %v81
  %83 = vmatmul.f32.gmra.mxu0 %v44
  %v84 = vpop.f32.mrf.mxu0
  %v85 = vadd.f32 0.0, %v84
  %86 = vdwg.mxu0
  %vm87 = vcmask 392192
  %88 = vst.msk [vmem:[%s2] sm:$0xff] %vm87, %v64
  %89 = vst.msk [vmem:[%s2 + $0x8] sm:$0xff] %vm87, %v67
  %90 = vst.msk [vmem:[%s2 + $0x10] sm:$0xff] %vm87, %v70
  %91 = vst.msk [vmem:[%s2 + $0x18] sm:$0xff] %vm87, %v73
  %92 = vst.msk [vmem:[%s2 + $0x20] sm:$0xff] %vm87, %v76
  %93 = vst.msk [vmem:[%s2 + $0x28] sm:$0xff] %vm87, %v79
  %94 = vst.msk [vmem:[%s2 + $0x30] sm:$0xff] %vm87, %v82
  %95 = vst.msk [vmem:[%s2 + $0x38] sm:$0xff] %vm87, %v85
  // Predicated region
  $region10: #{tpu_custom_call.1} parent=0 // pred_check
    _
  $region11: #{tpu_custom_call.1} parent=0 // pred_check_branch
    %97 = sbr.rel (0) target = $region13
  $region12: #{tpu_custom_call.1} parent=0 // pred_region
    _
  $region13: #{tpu_custom_call.1} parent=0 // pred_fallthru
    _
  // Predicated region
  $region14: #{tpu_custom_call.1} parent=0 // pred_check
    _
  $region15: #{tpu_custom_call.1} parent=0 // pred_check_branch
    %99 = sbr.rel (0) target = $region17
  $region16: #{tpu_custom_call.1} parent=0 // pred_region
    _
  $region17: #{tpu_custom_call.1} parent=0 // pred_fallthru
    _

</llo_original>
